<compile_context>
chip_gen: v7x
topology: tpu7x:2x2x1
jax: 0.10.0
libtpu: 0.0.40
codegen_flags: <defaults>
</compile_context>

<pallas_src>
import jax
import jax.numpy as jnp
from jax.experimental import pallas as pl
from jax.experimental.pallas import tpu as pltpu


def _round_up(x, m):
    return (x + m - 1) // m * m


def _binconv_matmul_kernel(cols_ref, w_ref, out_ref):
    # cols_ref: (TILE_M, KKC_pad) bf16 -- im2col patches for TILE_M output pixels
    # w_ref   : (KKC_pad, O_pad)  bf16 -- sign-binarized, zero-padded weights
    # out_ref : (TILE_M, O_pad)   f32  -- lane-dense output tile (unmasked stores)
    out_ref[...] = jnp.dot(
        cols_ref[...], w_ref[...], preferred_element_type=jnp.float32
    ).astype(out_ref.dtype)
    # NOTE: KKC_pad fits in a single contraction block at these channel counts;
    # for much larger Cin add a reduction grid axis ("arbitrary") with an f32
    # VMEM accumulator initialized/finalized under pl.when.


def binary_conv(x_nchw, weight_oihw, *, stride, padding, tile_m=128):
    """BinaryConv forward: conv2d(x, sign(weight), stride, padding)."""
    N, C, H, W = x_nchw.shape
    O, Cw, K, K2 = weight_oihw.shape
    assert Cw == C and K == K2

    # ---- weight path: binarize once (sign(0)=0 matches torch.sign), pack so
    #      the contraction index is (kh, kw, c)-major to match the im2col LHS.
    w_sign = jnp.sign(weight_oihw.astype(jnp.float32))            # (O, C, K, K)
    w2d = jnp.transpose(w_sign, (2, 3, 1, 0)).reshape(K * K * C, O)

    # ---- activation path: NCHW -> NHWC, zero-pad spatial dims, im2col.
    x = jnp.transpose(x_nchw, (0, 2, 3, 1))
    x = jnp.pad(x, ((0, 0), (padding, padding), (padding, padding), (0, 0)))
    Hp, Wp = H + 2 * padding, W + 2 * padding
    OH = (Hp - K) // stride + 1
    OW = (Wp - K) // stride + 1

    taps = []
    for kh in range(K):
        for kw in range(K):
            taps.append(
                jax.lax.slice(
                    x,
                    (0, kh, kw, 0),
                    (N, kh + (OH - 1) * stride + 1, kw + (OW - 1) * stride + 1, C),
                    (1, stride, stride, 1),
                )
            )  # (N, OH, OW, C)
    cols = jnp.stack(taps, axis=3).reshape(N * OH * OW, K * K * C)

    # ---- pad to lane/tile-friendly sizes (multiples of 128 / tile_m).
    M = N * OH * OW
    KKC = K * K * C
    M_pad = _round_up(M, tile_m)
    KKC_pad = _round_up(KKC, 128)
    O_pad = _round_up(O, 128)

    cols = jnp.pad(cols, ((0, M_pad - M), (0, KKC_pad - KKC))).astype(jnp.bfloat16)
    w2d = jnp.pad(w2d, ((0, KKC_pad - KKC), (0, O_pad - O))).astype(jnp.bfloat16)

    out_flat = pl.pallas_call(
        _binconv_matmul_kernel,
        out_shape=jax.ShapeDtypeStruct((M_pad, O_pad), jnp.float32),
        grid=(M_pad // tile_m,),
        in_specs=[
            pl.BlockSpec((tile_m, KKC_pad), lambda i: (i, 0)),
            pl.BlockSpec((KKC_pad, O_pad), lambda i: (0, 0)),
        ],
        out_specs=pl.BlockSpec((tile_m, O_pad), lambda i: (i, 0)),
        compiler_params=pltpu.CompilerParams(
            dimension_semantics=("parallel",),
            vmem_limit_bytes=16 * 1024 * 1024,
        ),
    )(cols, w2d)

    # Drop the zero padding, restore NCHW to match PyTorch conv2d output.
    out = out_flat[:M, :O].reshape(N, OH, OW, O)
    return jnp.transpose(out, (0, 3, 1, 2)).astype(x_nchw.dtype)


if __name__ == "__main__":
    # Module config (kernel_size=3, stride=1, padding=1, default sign() path).
    in_chn, out_chn, kernel_size, stride, padding = 4, 8, 3, 1, 1

    key = jax.random.PRNGKey(0)
    kx, kw = jax.random.split(key)

    # x: NCHW input
    x = jax.random.normal(kx, (2, in_chn, 16, 16), dtype=jnp.float32)
    # weight = torch.rand(shape) * 0.01  -> uniform [0, 0.01)
    weight = (
        jax.random.uniform(
            kw, (out_chn, in_chn, kernel_size, kernel_size), dtype=jnp.float32
        )
        * 0.01
    )

    out = jax.block_until_ready(binary_conv(x, weight, stride=stride, padding=padding))

    # Reference: XLA's native f32 conv with sign-binarized weights.
    ref = jax.lax.conv_general_dilated(
        x,
        jnp.sign(weight),
        window_strides=(stride, stride),
        padding=[(padding, padding), (padding, padding)],
        dimension_numbers=("NCHW", "OIHW", "NCHW"),
    )
    assert out.shape == ref.shape, (out.shape, ref.shape)
    # bf16 matmul operands (activations rounded to bf16; +-1 weights exact), so
    # the tolerance is looser than the pure-f32 version.
    assert jnp.allclose(out, ref, atol=1e-1, rtol=1e-2), float(
        jnp.max(jnp.abs(out - ref))
    )
    print("KERNEL_OK")
</pallas_src>

<mosaic_0001>
module attributes {stable_mosaic.version = 11 : i64} {
  func.func @_binconv_matmul_kernel(%arg0: i32, %arg1: memref<128x128xbf16, #tpu.memory_space<vmem>>, %arg2: memref<128x128xbf16, #tpu.memory_space<vmem>>, %arg3: memref<128x128xf32, #tpu.memory_space<vmem>>) attributes {dimension_semantics = [#tpu.dimension_semantics<parallel>], iteration_bounds = array<i64: 4>, scalar_prefetch = 0 : i64, scratch_operands = 0 : i64, tpu.core_type = #tpu.core_type<tc>, window_params = [{transform_indices = @transform_0, window_bounds = array<i64: 128, 128>}, {pipeline_mode = #tpu.pipeline_mode<synchronous>, transform_indices = @transform_1, window_bounds = array<i64: 128, 128>}, {transform_indices = @transform_2, window_bounds = array<i64: 128, 128>}]} {
    %c0 = arith.constant 0 : index
    %c0_0 = arith.constant 0 : index
    %0 = vector.load %arg1[%c0, %c0_0] : memref<128x128xbf16, #tpu.memory_space<vmem>>, vector<128x128xbf16>
    %c0_1 = arith.constant 0 : index
    %c0_2 = arith.constant 0 : index
    %1 = vector.load %arg2[%c0_1, %c0_2] : memref<128x128xbf16, #tpu.memory_space<vmem>>, vector<128x128xbf16>
    %cst = arith.constant dense<0.000000e+00> : vector<128x128xf32>
    %2 = tpu.matmul %0, %1, %cst {dimension_numbers = #tpu.dot_dimension_numbers<[1], [0], [0], [1], [0, 0, 1, 1], [], []>} : vector<128x128xbf16>, vector<128x128xbf16>, vector<128x128xf32> -> vector<128x128xf32>
    %c0_3 = arith.constant 0 : index
    %c0_4 = arith.constant 0 : index
    %3 = vector.load %arg3[%c0_3, %c0_4] : memref<128x128xf32, #tpu.memory_space<vmem>>, vector<128x128xf32>
    tpu.vector_store %arg3[%c0_3, %c0_4], %2 {strides = array<i32>} : memref<128x128xf32, #tpu.memory_space<vmem>>, vector<128x128xf32>,
    return
  }
  func.func @transform_0(%arg0: i32) -> (i32, i32) {
    %c0_i32 = arith.constant 0 : i32
    %c0_i32_0 = arith.constant 0 : i32
    return %arg0, %c0_i32 : i32, i32
  }
  func.func @transform_1(%arg0: i32) -> (i32, i32) {
    %c0_i32 = arith.constant 0 : i32
    %c0_i32_0 = arith.constant 0 : i32
    %c0_i32_1 = arith.constant 0 : i32
    return %c0_i32, %c0_i32_0 : i32, i32
  }
  func.func @transform_2(%arg0: i32) -> (i32, i32) {
    %c0_i32 = arith.constant 0 : i32
    %c0_i32_0 = arith.constant 0 : i32
    return %arg0, %c0_i32 : i32, i32
  }
}

</mosaic_0001>

<llo_original>
// kernel: tpu_custom_call.1
$region0: #{tpu_custom_call.1}
  #allocation0 [shape = 'u32[]', space=smem, size = 0x4, offset = 0x4, fixed_abs, tag = 'smem constant byte address 0x4 - core index']
  #allocation1 [shape = 'u32[144,128]{1,0:T(1,128)}', space=vmem, size = 0x12000, scoped, tag = 'internal scratch']
  %s0 = inlined_call_operand.hbm [shape: bf16[512,128], index: 0, kind: input, shape index: {}]
  %s1 = inlined_call_operand.hbm [shape: bf16[128,128], index: 1, kind: input, shape index: {}]
  %s2 = inlined_call_operand.hbm [shape: f32[512,128], index: 2, kind: output, shape index: {}]
  %s3 = sld [smem:[#allocation0]]
  $region49: #{tpu_custom_call.1} parent=0
    _
  %s5 = ssub.s32 1, %s3
  %s6 = scalar_select 0, %s5, %s3
  $region1: #{tpu_custom_call.1} parent=0
    #allocation2 [shape = 'u8[65536]{0}', space=vmem, size = 0x10000, scoped, tag = 'input window, operand 0']
    #allocation3 [shape = 's32[2]{0}', space=sflag, size = 0x8, scoped, tag = 'scoped memory for tpu_custom_call.1']
    #allocation4 [shape = 's32[2]{0}', space=sflag, size = 0x8, scoped, tag = 'scoped memory for tpu_custom_call.1']
    #allocation5 [shape = 'u8[32768]{0}', space=vmem, size = 0x8000, scoped, tag = 'input window, operand 1, single buffered']
    #allocation6 [shape = 's32[1]{0}', space=sflag, size = 0x4, scoped, tag = 'scoped memory for tpu_custom_call.1']
    #allocation7 [shape = 'u8[131072]{0}', space=vmem, size = 0x20000, scoped, tag = 'output window, operand 0']
    %7 = vsyncpa [#allocation3], 0
    %s8 = scalar_lea.sflag [#allocation3], 1
    %9 = vsyncpa %s8, 0
    %10 = vsyncpa [#allocation6], 0
    %11 = vsyncpa [#allocation4], 0
    %s12 = scalar_lea.sflag [#allocation4], 1
    %13 = vsyncpa %s12, 0
    loop: start=0, step=1, limit=6
    $region2: #{tpu_custom_call.1} parent=1 // loop_pre_header
      _
    $region3: #{tpu_custom_call.1} parent=1 // loop_header
      %s15 = sphi 0, %s19
      %p16 = scmp.ge.s32.totalorder %s15, 6
      %s25 = sphi 0, %s27
      %s28 = sphi 0, %s25
      %s29 = sphi 0, %s28
      %s45 = sphi 0, %s29
      %s49 = sphi 0, %s49
      %s51 = sphi 0, %s49
      %s52 = sphi 0, %s51
      %s66 = sphi 0, %s52
      %s72 = sphi 0, %s74
      %s75 = sphi 0, %s72
      %s76 = sphi 0, %s75
      %s92 = sphi 0, %s76
    $region4: #{tpu_custom_call.1} parent=1 // loop_header_branch
      %18 = sbr.rel (%p16) target = $region8
    $region5: #{tpu_custom_call.1} parent=1 // loop_body
      %s20 = ssub.s32 %s15, 1
      %s21 = ssub.s32 %s15, 2
      %s22 = sadd.s32 %s15, 1
      %s23 = ssub.s32 %s15, %s22
      %p24 = scmp.eq.s32.totalorder %s23, 0
      %s26 = sadd.s32 %s25, 1
      %s27 = scalar_select %p24, %s25, %s26
      %p30 = pneg %p24
      %p31 = scmp.eq.s32.totalorder %s15, 3
      %p32 = por %p30, %p31
      %p33 = scmp.ne.s32.totalorder %s25, %s28
      %p34 = scmp.eq.s32.totalorder %s15, 0
      %p35 = por %p33, %p34
      %p36 = scmp.ne.s32.totalorder %s25, %s28
      %p37 = scmp.eq.s32.totalorder %s20, 3
      %p38 = por %p36, %p37
      %p39 = scmp.ne.s32.totalorder %s28, %s29
      %p40 = scmp.eq.s32.totalorder %s20, 0
      %p41 = por %p39, %p40
      %p42 = scmp.ne.s32.totalorder %s28, %s29
      %p43 = scmp.eq.s32.totalorder %s21, 3
      %p44 = por %p42, %p43
      %p46 = scmp.ne.s32.totalorder %s29, %s45
      %p47 = scmp.eq.s32.totalorder %s21, 0
      %p48 = por %p46, %p47
      %s50 = sadd.s32 %s49, 1
      %p53 = scmp.eq.s32.totalorder %s15, 3
      %p54 = scmp.ne.s32.totalorder %s49, %s51
      %p55 = scmp.eq.s32.totalorder %s15, 0
      %p56 = por %p54, %p55
      %p57 = scmp.ne.s32.totalorder %s49, %s51
      %p58 = scmp.eq.s32.totalorder %s20, 3
      %p59 = por %p57, %p58
      %p60 = scmp.ne.s32.totalorder %s51, %s52
      %p61 = scmp.eq.s32.totalorder %s20, 0
      %p62 = por %p60, %p61
      %p63 = scmp.ne.s32.totalorder %s51, %s52
      %p64 = scmp.eq.s32.totalorder %s21, 3
      %p65 = por %p63, %p64
      %p67 = scmp.ne.s32.totalorder %s52, %s66
      %p68 = scmp.eq.s32.totalorder %s21, 0
      %p69 = por %p67, %p68
      %s70 = ssub.s32 %s15, %s22
      %p71 = scmp.eq.s32.totalorder %s70, 0
      %s73 = sadd.s32 %s72, 1
      %s74 = scalar_select %p71, %s72, %s73
      %p77 = pneg %p71
      %p78 = scmp.eq.s32.totalorder %s15, 3
      %p79 = por %p77, %p78
      %p80 = scmp.ne.s32.totalorder %s72, %s75
      %p81 = scmp.eq.s32.totalorder %s15, 0
      %p82 = por %p80, %p81
      %p83 = scmp.ne.s32.totalorder %s72, %s75
      %p84 = scmp.eq.s32.totalorder %s20, 3
      %p85 = por %p83, %p84
      %p86 = scmp.ne.s32.totalorder %s75, %s76
      %p87 = scmp.eq.s32.totalorder %s20, 0
      %p88 = por %p86, %p87
      %p89 = scmp.ne.s32.totalorder %s75, %s76
      %p90 = scmp.eq.s32.totalorder %s21, 3
      %p91 = por %p89, %p90
      %p93 = scmp.ne.s32.totalorder %s76, %s92
      %p94 = scmp.eq.s32.totalorder %s21, 0
      %p95 = por %p93, %p94
      %p96 = scmp.le.s32.totalorder 1, %s15
      %p97 = scmp.lt.s32.totalorder %s15, 5
      %p98 = pnand %p96, %p97
      %p99 = pneg %p98
      // Predicated region
      $region9: #{tpu_custom_call.1} parent=5 // pred_check
        _
      $region10: #{tpu_custom_call.1} parent=5 // pred_check_branch
        %101 = sbr.rel (%p98) target = $region12
      $region11: #{tpu_custom_call.1} parent=5 // pred_region
        %s102 = ssub.s32 %s15, 1
        // Predicated region
        $region13: #{tpu_custom_call.1} parent=11 // pred_check
          %p103 = pneg %p62
        $region14: #{tpu_custom_call.1} parent=11 // pred_check_branch
          %105 = sbr.rel (%p103) target = $region16
        $region15: #{tpu_custom_call.1} parent=11 // pred_region
          %s107 = ssub.s32 1024, 1024
          %108 = vsyncadd [#allocation6], %s107
          %s109 = sshll.u32 [#allocation5], 4
          %s110 = int_to_ptr.vmem [resolvable:$true] %s109
          %115 = dma.hbm_to_vmem [thread:$0]  %s1, 1024, %s110, [#allocation6], 64, 64, 4
        $region16: #{tpu_custom_call.1} parent=11 // pred_fallthru
          _
      $region12: #{tpu_custom_call.1} parent=5 // pred_fallthru
        _
      %p116 = scmp.lt.s32.totalorder %s15, 4
      // Predicated region
      $region17: #{tpu_custom_call.1} parent=5 // pred_check
        %p117 = pneg %p116
      $region18: #{tpu_custom_call.1} parent=5 // pred_check_branch
        %119 = sbr.rel (%p117) target = $region20
      $region19: #{tpu_custom_call.1} parent=5 // pred_region
        // Predicated region
        $region21: #{tpu_custom_call.1} parent=19 // pred_check
          %p120 = pneg %p35
        $region22: #{tpu_custom_call.1} parent=19 // pred_check_branch
          %122 = sbr.rel (%p120) target = $region24
        $region23: #{tpu_custom_call.1} parent=19 // pred_region
          %s123 = sand.u32 %s25, 1
          %s124 = scalar_lea.sflag [#allocation3], %s123
          %s125 = sand.u32 %s25, 1
          %s126 = smul.addr %s125, 64
          %s127 = scalar_lea.vmem [#allocation2], %s126
          %s128 = smul.u32 16, %s15
          %s130 = ssub.s32 1024, 1024
          %131 = vsyncadd %s124, %s130
          %s132 = smul.addr %s128, 64
          %s133 = scalar_lea.hbm %s0, %s132
          %s134 = sshll.u32 %s127, 4
          %s135 = int_to_ptr.vmem [resolvable:$true] %s134
          %140 = dma.hbm_to_vmem [thread:$0]  %s133, 1024, %s135, %s124, 64, 64, 4
        $region24: #{tpu_custom_call.1} parent=19 // pred_fallthru
          _
      $region20: #{tpu_custom_call.1} parent=5 // pred_fallthru
        _
      %p141 = scmp.le.s32.totalorder 1, %s15
      %p142 = scmp.lt.s32.totalorder %s15, 5
      %p143 = pnand %p141, %p142
      %p144 = pneg %p143
      // Predicated region
      $region25: #{tpu_custom_call.1} parent=5 // pred_check
        _
      $region26: #{tpu_custom_call.1} parent=5 // pred_check_branch
        %146 = sbr.rel (%p143) target = $region28
      $region27: #{tpu_custom_call.1} parent=5 // pred_region
        %s147 = ssub.s32 %s15, 1
        %s148 = sand.u32 %s28, 1
        %s149 = scalar_lea.sflag [#allocation3], %s148
        %s150 = sand.u32 %s28, 1
        %s151 = smul.addr %s150, 64
        %s152 = scalar_lea.vmem [#allocation2], %s151
        // Predicated region
        $region29: #{tpu_custom_call.1} parent=27 // pred_check
          %p153 = pneg %p41
        $region30: #{tpu_custom_call.1} parent=27 // pred_check_branch
          %155 = sbr.rel (%p153) target = $region32
        $region31: #{tpu_custom_call.1} parent=27 // pred_region
          %156 = dma.done %s149, 1024
        $region32: #{tpu_custom_call.1} parent=27 // pred_fallthru
          _
        // Predicated region
        $region33: #{tpu_custom_call.1} parent=27 // pred_check
          %p157 = pneg %p62
        $region34: #{tpu_custom_call.1} parent=27 // pred_check_branch
          %159 = sbr.rel (%p157) target = $region36
        $region35: #{tpu_custom_call.1} parent=27 // pred_region
          %160 = dma.done [#allocation6], 1024
        $region36: #{tpu_custom_call.1} parent=27 // pred_fallthru
          _
        %s161 = sand.u32 %s28, 1
        %s162 = scalar_lea.sflag [#allocation3], %s161
        %s163 = sand.u32 %s28, 1
        %s164 = smul.addr %s163, 64
        %s165 = scalar_lea.vmem [#allocation2], %s164
        %p166 = pneg %p41
        %p167 = pneg %p38
        %p168 = pneg %p62
        %p169 = pneg %p59
        %p170 = pneg %p88
        %p171 = pneg %p85
        %s172 = sand.u32 %s75, 1
        %s173 = scalar_lea.sflag [#allocation4], %s172
        %s174 = sand.u32 %s75, 1
        %s175 = smul.addr %s174, 128
        %s176 = scalar_lea.vmem [#allocation7], %s175
        %s177 = smul.u32 16, %s20
        %s178 = smul.u32 16, %s20
        %v180 = vld [vmem:[%s152] sm:$0xf]
        %v181 = vld [vmem:[%s152 + $0x4] sm:$0xf]
        %v182 = vld [vmem:[%s152 + $0x8] sm:$0xf]
        %v183 = vld [vmem:[%s152 + $0xc] sm:$0xf]
        %v184 = vld [vmem:[%s152 + $0x10] sm:$0xf]
        %v185 = vld [vmem:[%s152 + $0x14] sm:$0xf]
        %v186 = vld [vmem:[%s152 + $0x18] sm:$0xf]
        %v187 = vld [vmem:[%s152 + $0x1c] sm:$0xf]
        %v188 = vld [vmem:[%s152 + $0x20] sm:$0xf]
        %v189 = vld [vmem:[%s152 + $0x24] sm:$0xf]
        %v190 = vld [vmem:[%s152 + $0x28] sm:$0xf]
        %v191 = vld [vmem:[%s152 + $0x2c] sm:$0xf]
        %v192 = vld [vmem:[%s152 + $0x30] sm:$0xf]
        %v193 = vld [vmem:[%s152 + $0x34] sm:$0xf]
        %v194 = vld [vmem:[%s152 + $0x38] sm:$0xf]
        %v195 = vld [vmem:[%s152 + $0x3c] sm:$0xf]
        %v196 = vld [vmem:[#allocation5] sm:$0xf]
        %v197 = vld [vmem:[#allocation5 + $0x4] sm:$0xf]
        %v198 = vld [vmem:[#allocation5 + $0x8] sm:$0xf]
        %v199 = vld [vmem:[#allocation5 + $0xc] sm:$0xf]
        %v200 = vld [vmem:[#allocation5 + $0x10] sm:$0xf]
        %v201 = vld [vmem:[#allocation5 + $0x14] sm:$0xf]
        %v202 = vld [vmem:[#allocation5 + $0x18] sm:$0xf]
        %v203 = vld [vmem:[#allocation5 + $0x1c] sm:$0xf]
        %v204 = vld [vmem:[#allocation5 + $0x20] sm:$0xf]
        %v205 = vld [vmem:[#allocation5 + $0x24] sm:$0xf]
        %v206 = vld [vmem:[#allocation5 + $0x28] sm:$0xf]
        %v207 = vld [vmem:[#allocation5 + $0x2c] sm:$0xf]
        %v208 = vld [vmem:[#allocation5 + $0x30] sm:$0xf]
        %v209 = vld [vmem:[#allocation5 + $0x34] sm:$0xf]
        %v210 = vld [vmem:[#allocation5 + $0x38] sm:$0xf]
        %v211 = vld [vmem:[#allocation5 + $0x3c] sm:$0xf]
        %v228 = vunpack.c.l.b16 %v180
        %v229 = vunpack.c.l.b16 %v181
        %v230 = vunpack.c.l.b16 %v182
        %v231 = vunpack.c.l.b16 %v183
        %v232 = vunpack.c.l.b16 %v184
        %v233 = vunpack.c.l.b16 %v185
        %v234 = vunpack.c.l.b16 %v186
        %v235 = vunpack.c.l.b16 %v187
        %v236 = vunpack.c.l.b16 %v188
        %v237 = vunpack.c.l.b16 %v189
        %v238 = vunpack.c.l.b16 %v190
        %v239 = vunpack.c.l.b16 %v191
        %v240 = vunpack.c.l.b16 %v192
        %v241 = vunpack.c.l.b16 %v193
        %v242 = vunpack.c.l.b16 %v194
        %v243 = vunpack.c.l.b16 %v195
        %v244 = vpack.c.b16 %v229, %v228
        %v245 = vpack.c.b16 %v231, %v230
        %v246 = vpack.c.b16 %v233, %v232
        %v247 = vpack.c.b16 %v235, %v234
        %v248 = vpack.c.b16 %v237, %v236
        %v249 = vpack.c.b16 %v239, %v238
        %v250 = vpack.c.b16 %v241, %v240
        %v251 = vpack.c.b16 %v243, %v242
        %v276 = vunpack.c.l.b16 %v196
        %v277 = vunpack.c.l.b16 %v197
        %v278 = vunpack.c.l.b16 %v198
        %v279 = vunpack.c.l.b16 %v199
        %v280 = vunpack.c.l.b16 %v200
        %v281 = vunpack.c.l.b16 %v201
        %v282 = vunpack.c.l.b16 %v202
        %v283 = vunpack.c.l.b16 %v203
        %v284 = vunpack.c.l.b16 %v204
        %v285 = vunpack.c.l.b16 %v205
        %v286 = vunpack.c.l.b16 %v206
        %v287 = vunpack.c.l.b16 %v207
        %v288 = vunpack.c.l.b16 %v208
        %v289 = vunpack.c.l.b16 %v209
        %v290 = vunpack.c.l.b16 %v210
        %v291 = vunpack.c.l.b16 %v211
        %v292 = vpack.c.b16 %v277, %v276
        %v293 = vpack.c.b16 %v279, %v278
        %v294 = vpack.c.b16 %v281, %v280
        %v295 = vpack.c.b16 %v283, %v282
        %v296 = vpack.c.b16 %v285, %v284
        %v297 = vpack.c.b16 %v287, %v286
        %v298 = vpack.c.b16 %v289, %v288
        %v299 = vpack.c.b16 %v291, %v290
        %308 = vmatprep.subr.bf16.mxu0 0
        %309 = vmatpush1.bf16.msra.mxu0 %v292
        %310 = vmatprep.subr.bf16.mxu0 0
        %311 = vmatpush1.bf16.msra.mxu0 %v293
        %312 = vmatprep.subr.bf16.mxu0 0
        %313 = vmatpush1.bf16.msra.mxu0 %v294
        %314 = vmatprep.subr.bf16.mxu0 0
        %315 = vmatpush1.bf16.msra.mxu0 %v295
        %316 = vmatprep.subr.bf16.mxu0 0
        %317 = vmatpush1.bf16.msra.mxu0 %v296
        %318 = vmatprep.subr.bf16.mxu0 0
        %319 = vmatpush1.bf16.msra.mxu0 %v297
        %320 = vmatprep.subr.bf16.mxu0 0
        %321 = vmatpush1.bf16.msra.mxu0 %v298
        %322 = vmatprep.subr.bf16.mxu0 0
        %323 = vmatpush1.bf16.msra.mxu0 %v299
        %324 = vmatprep.subr.bf16.mxu0 0
        %325 = vmatpush1.bf16.msra.mxu0 0
        %326 = vmatprep.subr.bf16.mxu0 0
        %327 = vmatpush1.bf16.msra.mxu0 0
        %328 = vmatprep.subr.bf16.mxu0 0
        %329 = vmatpush1.bf16.msra.mxu0 0
        %330 = vmatprep.subr.bf16.mxu0 0
        %331 = vmatpush1.bf16.msra.mxu0 0
        %332 = vmatprep.subr.bf16.mxu0 0
        %333 = vmatpush1.bf16.msra.mxu0 0
        %334 = vmatprep.subr.bf16.mxu0 0
        %335 = vmatpush1.bf16.msra.mxu0 0
        %336 = vmatprep.subr.bf16.mxu0 0
        %337 = vmatpush1.bf16.msra.mxu0 0
        %338 = vmatprep.subr.bf16.mxu0 0
        %339 = vmatpush1.bf16.msra.mxu0 0
        %340 = vmatprep.mubr.bf16.mxu0 0
        %341 = vmatmul.mubr.bf16.gmra.mrb[0].mxu0 %v244
        %v342 = vpop.f32.mrb[0].mxu0
        %v343 = vadd.f32 0.0, %v342
        %v344 = vpop.f32.mrb[0].mxu0
        %v345 = vpop.f32.mrb[0].mxu0
        %v346 = vadd.f32 0.0, %v345
        %v347 = vpop.f32.mrb[0].mxu0
        %348 = vmatprep.mubr.bf16.mxu0 0
        %349 = vmatmul.mubr.bf16.gmra.mrb[0].mxu0 %v245
        %v350 = vpop.f32.mrb[0].mxu0
        %v351 = vadd.f32 0.0, %v350
        %v352 = vpop.f32.mrb[0].mxu0
        %v353 = vpop.f32.mrb[0].mxu0
        %v354 = vadd.f32 0.0, %v353
        %v355 = vpop.f32.mrb[0].mxu0
        %356 = vmatprep.mubr.bf16.mxu0 0
        %357 = vmatmul.mubr.bf16.gmra.mrb[0].mxu0 %v246
        %v358 = vpop.f32.mrb[0].mxu0
        %v359 = vadd.f32 0.0, %v358
        %v360 = vpop.f32.mrb[0].mxu0
        %v361 = vpop.f32.mrb[0].mxu0
        %v362 = vadd.f32 0.0, %v361
        %v363 = vpop.f32.mrb[0].mxu0
        %364 = vmatprep.mubr.bf16.mxu0 0
        %365 = vmatmul.mubr.bf16.gmra.mrb[0].mxu0 %v247
        %v366 = vpop.f32.mrb[0].mxu0
        %v367 = vadd.f32 0.0, %v366
        %v368 = vpop.f32.mrb[0].mxu0
        %v369 = vpop.f32.mrb[0].mxu0
        %v370 = vadd.f32 0.0, %v369
        %v371 = vpop.f32.mrb[0].mxu0
        %372 = vmatprep.mubr.bf16.mxu0 0
        %373 = vmatmul.mubr.bf16.gmra.mrb[0].mxu0 %v248
        %v374 = vpop.f32.mrb[0].mxu0
        %v375 = vadd.f32 0.0, %v374
        %v376 = vpop.f32.mrb[0].mxu0
        %v377 = vpop.f32.mrb[0].mxu0
        %v378 = vadd.f32 0.0, %v377
        %v379 = vpop.f32.mrb[0].mxu0
        %380 = vmatprep.mubr.bf16.mxu0 0
        %381 = vmatmul.mubr.bf16.gmra.mrb[0].mxu0 %v249
        %v382 = vpop.f32.mrb[0].mxu0
        %v383 = vadd.f32 0.0, %v382
        %v384 = vpop.f32.mrb[0].mxu0
        %v385 = vpop.f32.mrb[0].mxu0
        %v386 = vadd.f32 0.0, %v385
        %v387 = vpop.f32.mrb[0].mxu0
        %388 = vmatprep.mubr.bf16.mxu0 0
        %389 = vmatmul.mubr.bf16.gmra.mrb[0].mxu0 %v250
        %v390 = vpop.f32.mrb[0].mxu0
        %v391 = vadd.f32 0.0, %v390
        %v392 = vpop.f32.mrb[0].mxu0
        %v393 = vpop.f32.mrb[0].mxu0
        %v394 = vadd.f32 0.0, %v393
        %v395 = vpop.f32.mrb[0].mxu0
        %396 = vmatprep.mubr.bf16.mxu0 0
        %397 = vmatmul.mubr.bf16.gmra.mrb[0].mxu0 %v251
        %v398 = vpop.f32.mrb[0].mxu0
        %v399 = vadd.f32 0.0, %v398
        %v400 = vpop.f32.mrb[0].mxu0
        %v401 = vpop.f32.mrb[0].mxu0
        %v402 = vadd.f32 0.0, %v401
        %v403 = vpop.f32.mrb[0].mxu0
        %404 = vdwg.mxu0
        %405 = vst [vmem:[%s176] sm:$0xff] %v343
        %406 = vst [vmem:[%s176 + $0x8] sm:$0xff] %v346
        %407 = vst [vmem:[%s176 + $0x10] sm:$0xff] %v351
        %408 = vst [vmem:[%s176 + $0x18] sm:$0xff] %v354
        %409 = vst [vmem:[%s176 + $0x20] sm:$0xff] %v359
        %410 = vst [vmem:[%s176 + $0x28] sm:$0xff] %v362
        %411 = vst [vmem:[%s176 + $0x30] sm:$0xff] %v367
        %412 = vst [vmem:[%s176 + $0x38] sm:$0xff] %v370
        %413 = vst [vmem:[%s176 + $0x40] sm:$0xff] %v375
        %414 = vst [vmem:[%s176 + $0x48] sm:$0xff] %v378
        %415 = vst [vmem:[%s176 + $0x50] sm:$0xff] %v383
        %416 = vst [vmem:[%s176 + $0x58] sm:$0xff] %v386
        %417 = vst [vmem:[%s176 + $0x60] sm:$0xff] %v391
        %418 = vst [vmem:[%s176 + $0x68] sm:$0xff] %v394
        %419 = vst [vmem:[%s176 + $0x70] sm:$0xff] %v399
        %420 = vst [vmem:[%s176 + $0x78] sm:$0xff] %v402
        %s421 = sand.u32 %s75, 1
        %s422 = scalar_lea.sflag [#allocation4], %s421
        %s423 = sand.u32 %s75, 1
        %s424 = smul.addr %s423, 128
        %s425 = scalar_lea.vmem [#allocation7], %s424
        // Predicated region
        $region37: #{tpu_custom_call.1} parent=27 // pred_check
          %p426 = pneg %p85
        $region38: #{tpu_custom_call.1} parent=27 // pred_check_branch
          %428 = sbr.rel (%p426) target = $region40
        $region39: #{tpu_custom_call.1} parent=27 // pred_region
          %s429 = smul.u32 16, %s20
          %s431 = ssub.s32 2048, 2048
          %432 = vsyncadd %s422, %s431
          %s433 = smul.addr %s429, 128
          %s434 = scalar_lea.hbm %s2, %s433
          %s435 = sshll.u32 %s425, 4
          %s436 = int_to_ptr.vmem [resolvable:$true] %s435
          %441 = dma.vmem_to_hbm [thread:$0]  %s436, 2048, %s434, %s422, 128, 128, 8
        $region40: #{tpu_custom_call.1} parent=27 // pred_fallthru
          _
      $region28: #{tpu_custom_call.1} parent=5 // pred_fallthru
        _
      %p442 = scmp.le.s32.totalorder 2, %s15
      // Predicated region
      $region41: #{tpu_custom_call.1} parent=5 // pred_check
        %p443 = pneg %p442
      $region42: #{tpu_custom_call.1} parent=5 // pred_check_branch
        %445 = sbr.rel (%p443) target = $region44
      $region43: #{tpu_custom_call.1} parent=5 // pred_region
        %s446 = ssub.s32 %s15, 2
        // Predicated region
        $region45: #{tpu_custom_call.1} parent=43 // pred_check
          %p447 = pneg %p91
        $region46: #{tpu_custom_call.1} parent=43 // pred_check_branch
          %449 = sbr.rel (%p447) target = $region48
        $region47: #{tpu_custom_call.1} parent=43 // pred_region
          %s450 = sand.u32 %s76, 1
          %s451 = scalar_lea.sflag [#allocation4], %s450
          %s452 = sand.u32 %s76, 1
          %s453 = smul.addr %s452, 128
          %s454 = scalar_lea.vmem [#allocation7], %s453
          %455 = dma.done %s451, 2048
        $region48: #{tpu_custom_call.1} parent=43 // pred_fallthru
          _
      $region44: #{tpu_custom_call.1} parent=5 // pred_fallthru
        _
    $region6: #{tpu_custom_call.1} parent=1 // loop_footer
      %s19 = sadd.s32 1, %s15
    $region7: #{tpu_custom_call.1} parent=1 // loop_footer_branch
      %14 = sbr.rel target = $region3
    $region8: #{tpu_custom_call.1} parent=1 // loop_exit
      _
    %456 = vsyncpa [#allocation3], 1
    %s457 = scalar_lea.sflag [#allocation3], 1
    %458 = vsyncpa %s457, 1
    %459 = vsyncpa [#allocation6], 1
    %460 = vsyncpa [#allocation4], 1
    %s461 = scalar_lea.sflag [#allocation4], 1
    %462 = vsyncpa %s461, 1

</llo_original>
